<compile_context>
chip_gen: v7x
topology: tpu7x:2x2x1
jax: 0.10.0
libtpu: 0.0.40
codegen_flags: <defaults>
</compile_context>

<pallas_src>
import math

import jax
import jax.numpy as jnp
from jax.experimental import pallas as pl
from jax.experimental.pallas import tpu as pltpu

LANE = 128  # lane width: pad the tiny n_actions output up to this


def actor_forward_kernel(x_ref, w1_ref, b1_ref, w2_ref, b2_ref, w3_ref, b3_ref, o_ref):
    # Layer 1: Linear + ReLU (bf16 inputs, f32 accumulation)
    h1 = jnp.dot(x_ref[...], w1_ref[...], preferred_element_type=jnp.float32)
    h1 = jnp.maximum(h1 + b1_ref[...], 0.0)
    # Layer 2: Linear + ReLU
    h2 = jnp.dot(h1.astype(jnp.bfloat16), w2_ref[...],
                 preferred_element_type=jnp.float32)
    h2 = jnp.maximum(h2 + b2_ref[...], 0.0)
    # Layer 3: Linear (no activation), lane-dense (padded) output
    out = jnp.dot(h2.astype(jnp.bfloat16), w3_ref[...],
                  preferred_element_type=jnp.float32) + b3_ref[...]
    o_ref[...] = out.astype(o_ref.dtype)


def actor_forward(x, params, n_actions, *, tm=128):
    """x: [B, input_dims] float32. params: dict of (W, b) per layer.
    W stored as [in, out] bfloat16 (transposed vs. PyTorch), b as [1, out] float32."""
    w1, b1 = params["fc1"]
    w2, b2 = params["fc2"]
    w3, b3 = params["fc3"]
    B, K = x.shape

    # Lane-dense output: zero-pad fc3 out-features up to a full 128-lane block.
    n_pad = max(LANE, LANE * pl.cdiv(w3.shape[1], LANE))
    w3p = jnp.zeros((w3.shape[0], n_pad), w3.dtype).at[:, : w3.shape[1]].set(w3)
    b3p = jnp.zeros((1, n_pad), b3.dtype).at[:, : b3.shape[1]].set(b3)

    # Pad the batch to a multiple of the row tile (padded rows sliced off below).
    Bp = tm * pl.cdiv(B, tm)
    if Bp != B:
        x = jnp.pad(x, ((0, Bp - B), (0, 0)))
    x = x.astype(jnp.bfloat16)

    grid = (Bp // tm,)
    out = pl.pallas_call(
        actor_forward_kernel,
        out_shape=jax.ShapeDtypeStruct((Bp, n_pad), jnp.float32),
        grid_spec=pltpu.PrefetchScalarGridSpec(
            num_scalar_prefetch=0,
            grid=grid,
            in_specs=[
                # Activations: tiled over the batch grid (double-buffered by Pallas).
                pl.BlockSpec((tm, K), lambda i: (i, 0)),
                # Weights / biases: constant block -> resident in VMEM, DMA'd once.
                pl.BlockSpec(w1.shape, lambda i: (0, 0)),
                pl.BlockSpec(b1.shape, lambda i: (0, 0)),
                pl.BlockSpec(w2.shape, lambda i: (0, 0)),
                pl.BlockSpec(b2.shape, lambda i: (0, 0)),
                pl.BlockSpec(w3p.shape, lambda i: (0, 0)),
                pl.BlockSpec(b3p.shape, lambda i: (0, 0)),
            ],
            out_specs=pl.BlockSpec((tm, n_pad), lambda i: (i, 0)),
        ),
        compiler_params=pltpu.CompilerParams(
            dimension_semantics=("parallel",),  # shards batch tiles across TCs on v7x
        ),
    )(x, w1, b1, w2, b2, w3p, b3p)

    return out[:B, :n_actions]


def init_linear_params(key, fan_in, fan_out):
    """PyTorch nn.Linear default init: U(-1/sqrt(fan_in), 1/sqrt(fan_in)).
    W stored as [in, out] bfloat16; bias as [1, out] float32."""
    kw, kb = jax.random.split(key)
    bound = 1.0 / math.sqrt(fan_in)
    W = jax.random.uniform(kw, (fan_in, fan_out), jnp.float32, -bound, bound)
    b = jax.random.uniform(kb, (1, fan_out), jnp.float32, -bound, bound)
    return W.astype(jnp.bfloat16), b


def reference_forward(x, params):
    """Pure-JAX reference with identical bf16-input / f32-accumulation casts."""
    w1, b1 = params["fc1"]
    w2, b2 = params["fc2"]
    w3, b3 = params["fc3"]
    h = jnp.dot(x.astype(jnp.bfloat16), w1, preferred_element_type=jnp.float32) + b1
    h = jnp.maximum(h, 0.0)
    h = jnp.dot(h.astype(jnp.bfloat16), w2, preferred_element_type=jnp.float32) + b2
    h = jnp.maximum(h, 0.0)
    return jnp.dot(h.astype(jnp.bfloat16), w3, preferred_element_type=jnp.float32) + b3


if __name__ == "__main__":
    # Shapes consistent with the module: input_dims=16, fc1=fc2=256, n_actions=2.
    # Batch chosen to exercise both the batch grid (>1 tile) and ragged padding.
    batch = 200
    input_dims = 16
    fc1_dims = 256
    fc2_dims = 256
    n_actions = 2

    key = jax.random.PRNGKey(0)
    k_x, k1, k2, k3 = jax.random.split(key, 4)

    params = {
        "fc1": init_linear_params(k1, input_dims, fc1_dims),
        "fc2": init_linear_params(k2, fc1_dims, fc2_dims),
        "fc3": init_linear_params(k3, fc2_dims, n_actions),
    }
    x = jax.random.normal(k_x, (batch, input_dims), jnp.float32)

    out = actor_forward(x, params, n_actions)
    out = jax.block_until_ready(out)

    ref = reference_forward(x, params)
    assert out.shape == (batch, n_actions), out.shape
    assert jnp.allclose(out, ref, atol=1e-2, rtol=1e-2), "mismatch vs reference"

    print("KERNEL_OK")
</pallas_src>

<mosaic_0001>
module attributes {stable_mosaic.version = 11 : i64} {
  func.func @actor_forward_kernel(%arg0: i32, %arg1: memref<128x16xbf16, #tpu.memory_space<vmem>>, %arg2: memref<16x256xbf16, #tpu.memory_space<vmem>>, %arg3: memref<1x256xf32, #tpu.memory_space<vmem>>, %arg4: memref<256x256xbf16, #tpu.memory_space<vmem>>, %arg5: memref<1x256xf32, #tpu.memory_space<vmem>>, %arg6: memref<256x128xbf16, #tpu.memory_space<vmem>>, %arg7: memref<1x128xf32, #tpu.memory_space<vmem>>, %arg8: memref<128x128xf32, #tpu.memory_space<vmem>>) attributes {dimension_semantics = [#tpu.dimension_semantics<parallel>], iteration_bounds = array<i64: 2>, scalar_prefetch = 0 : i64, scratch_operands = 0 : i64, tpu.core_type = #tpu.core_type<tc>, window_params = [{transform_indices = @transform_0, window_bounds = array<i64: 128, 16>}, {pipeline_mode = #tpu.pipeline_mode<synchronous>, transform_indices = @transform_1, window_bounds = array<i64: 16, 256>}, {pipeline_mode = #tpu.pipeline_mode<synchronous>, transform_indices = @transform_2, window_bounds = array<i64: 1, 256>}, {pipeline_mode = #tpu.pipeline_mode<synchronous>, transform_indices = @transform_3, window_bounds = array<i64: 256, 256>}, {pipeline_mode = #tpu.pipeline_mode<synchronous>, transform_indices = @transform_4, window_bounds = array<i64: 1, 256>}, {pipeline_mode = #tpu.pipeline_mode<synchronous>, transform_indices = @transform_5, window_bounds = array<i64: 256, 128>}, {pipeline_mode = #tpu.pipeline_mode<synchronous>, transform_indices = @transform_6, window_bounds = array<i64: 1, 128>}, {transform_indices = @transform_7, window_bounds = array<i64: 128, 128>}]} {
    %c0 = arith.constant 0 : index
    %c0_0 = arith.constant 0 : index
    %0 = vector.load %arg1[%c0, %c0_0] : memref<128x16xbf16, #tpu.memory_space<vmem>>, vector<128x16xbf16>
    %c0_1 = arith.constant 0 : index
    %c0_2 = arith.constant 0 : index
    %1 = vector.load %arg2[%c0_1, %c0_2] : memref<16x256xbf16, #tpu.memory_space<vmem>>, vector<16x256xbf16>
    %cst = arith.constant dense<0.000000e+00> : vector<128x256xf32>
    %2 = tpu.matmul %0, %1, %cst {dimension_numbers = #tpu.dot_dimension_numbers<[1], [0], [0], [1], [0, 0, 1, 1], [], []>} : vector<128x16xbf16>, vector<16x256xbf16>, vector<128x256xf32> -> vector<128x256xf32>
    %c0_3 = arith.constant 0 : index
    %c0_4 = arith.constant 0 : index
    %3 = vector.load %arg3[%c0_3, %c0_4] : memref<1x256xf32, #tpu.memory_space<vmem>>, vector<1x256xf32>
    %4 = vector.broadcast %3 : vector<1x256xf32> to vector<128x256xf32>
    %5 = arith.addf %2, %4 : vector<128x256xf32>
    %cst_5 = arith.constant 0.000000e+00 : f32
    %6 = vector.broadcast %cst_5 : f32 to vector<128x256xf32>
    %7 = arith.maximumf %5, %6 : vector<128x256xf32>
    %8 = arith.truncf %7 : vector<128x256xf32> to vector<128x256xbf16>
    %c0_6 = arith.constant 0 : index
    %c0_7 = arith.constant 0 : index
    %9 = vector.load %arg4[%c0_6, %c0_7] : memref<256x256xbf16, #tpu.memory_space<vmem>>, vector<256x256xbf16>
    %cst_8 = arith.constant dense<0.000000e+00> : vector<128x256xf32>
    %10 = tpu.matmul %8, %9, %cst_8 {dimension_numbers = #tpu.dot_dimension_numbers<[1], [0], [0], [1], [0, 0, 1, 1], [], []>} : vector<128x256xbf16>, vector<256x256xbf16>, vector<128x256xf32> -> vector<128x256xf32>
    %c0_9 = arith.constant 0 : index
    %c0_10 = arith.constant 0 : index
    %11 = vector.load %arg5[%c0_9, %c0_10] : memref<1x256xf32, #tpu.memory_space<vmem>>, vector<1x256xf32>
    %12 = vector.broadcast %11 : vector<1x256xf32> to vector<128x256xf32>
    %13 = arith.addf %10, %12 : vector<128x256xf32>
    %cst_11 = arith.constant 0.000000e+00 : f32
    %14 = vector.broadcast %cst_11 : f32 to vector<128x256xf32>
    %15 = arith.maximumf %13, %14 : vector<128x256xf32>
    %16 = arith.truncf %15 : vector<128x256xf32> to vector<128x256xbf16>
    %c0_12 = arith.constant 0 : index
    %c0_13 = arith.constant 0 : index
    %17 = vector.load %arg6[%c0_12, %c0_13] : memref<256x128xbf16, #tpu.memory_space<vmem>>, vector<256x128xbf16>
    %cst_14 = arith.constant dense<0.000000e+00> : vector<128x128xf32>
    %18 = tpu.matmul %16, %17, %cst_14 {dimension_numbers = #tpu.dot_dimension_numbers<[1], [0], [0], [1], [0, 0, 1, 1], [], []>} : vector<128x256xbf16>, vector<256x128xbf16>, vector<128x128xf32> -> vector<128x128xf32>
    %c0_15 = arith.constant 0 : index
    %c0_16 = arith.constant 0 : index
    %19 = vector.load %arg7[%c0_15, %c0_16] : memref<1x128xf32, #tpu.memory_space<vmem>>, vector<1x128xf32>
    %20 = vector.broadcast %19 : vector<1x128xf32> to vector<128x128xf32>
    %21 = arith.addf %18, %20 : vector<128x128xf32>
    %c0_17 = arith.constant 0 : index
    %c0_18 = arith.constant 0 : index
    %22 = vector.load %arg8[%c0_17, %c0_18] : memref<128x128xf32, #tpu.memory_space<vmem>>, vector<128x128xf32>
    tpu.vector_store %arg8[%c0_17, %c0_18], %21 {strides = array<i32>} : memref<128x128xf32, #tpu.memory_space<vmem>>, vector<128x128xf32>,
    return
  }
  func.func @transform_0(%arg0: i32) -> (i32, i32) {
    %c0_i32 = arith.constant 0 : i32
    %c0_i32_0 = arith.constant 0 : i32
    return %arg0, %c0_i32 : i32, i32
  }
  func.func @transform_1(%arg0: i32) -> (i32, i32) {
    %c0_i32 = arith.constant 0 : i32
    %c0_i32_0 = arith.constant 0 : i32
    %c0_i32_1 = arith.constant 0 : i32
    return %c0_i32, %c0_i32_0 : i32, i32
  }
  func.func @transform_2(%arg0: i32) -> (i32, i32) {
    %c0_i32 = arith.constant 0 : i32
    %c0_i32_0 = arith.constant 0 : i32
    %c0_i32_1 = arith.constant 0 : i32
    return %c0_i32, %c0_i32_0 : i32, i32
  }
  func.func @transform_3(%arg0: i32) -> (i32, i32) {
    %c0_i32 = arith.constant 0 : i32
    %c0_i32_0 = arith.constant 0 : i32
    %c0_i32_1 = arith.constant 0 : i32
    return %c0_i32, %c0_i32_0 : i32, i32
  }
  func.func @transform_4(%arg0: i32) -> (i32, i32) {
    %c0_i32 = arith.constant 0 : i32
    %c0_i32_0 = arith.constant 0 : i32
    %c0_i32_1 = arith.constant 0 : i32
    return %c0_i32, %c0_i32_0 : i32, i32
  }
  func.func @transform_5(%arg0: i32) -> (i32, i32) {
    %c0_i32 = arith.constant 0 : i32
    %c0_i32_0 = arith.constant 0 : i32
    %c0_i32_1 = arith.constant 0 : i32
    return %c0_i32, %c0_i32_0 : i32, i32
  }
  func.func @transform_6(%arg0: i32) -> (i32, i32) {
    %c0_i32 = arith.constant 0 : i32
    %c0_i32_0 = arith.constant 0 : i32
    %c0_i32_1 = arith.constant 0 : i32
    return %c0_i32, %c0_i32_0 : i32, i32
  }
  func.func @transform_7(%arg0: i32) -> (i32, i32) {
    %c0_i32 = arith.constant 0 : i32
    %c0_i32_0 = arith.constant 0 : i32
    return %arg0, %c0_i32 : i32, i32
  }
}

</mosaic_0001>

<llo_original>
// kernel: tpu_custom_call.1
$region0: #{tpu_custom_call.1}
  #allocation0 [shape = 'u32[]', space=smem, size = 0x4, offset = 0x4, fixed_abs, tag = 'smem constant byte address 0x4 - core index']
  #allocation1 [shape = 'u32[144,128]{1,0:T(1,128)}', space=vmem, size = 0x12000, scoped, tag = 'internal scratch']
  %s0 = inlined_call_operand.vmem [shape: bf16[256,16], index: 0, kind: input, shape index: {}]
  %s1 = inlined_call_operand.vmem [shape: bf16[16,256], index: 1, kind: input, shape index: {}]
  %s2 = inlined_call_operand.vmem [shape: f32[1,256], index: 2, kind: input, shape index: {}]
  %s3 = inlined_call_operand.hbm [shape: bf16[256,256], index: 3, kind: input, shape index: {}]
  %s4 = inlined_call_operand.vmem [shape: f32[1,256], index: 4, kind: input, shape index: {}]
  %s5 = inlined_call_operand.vmem [shape: bf16[256,128], index: 5, kind: input, shape index: {}]
  %s6 = inlined_call_operand.vmem [shape: f32[1,128], index: 6, kind: input, shape index: {}]
  %s7 = inlined_call_operand.hbm [shape: f32[256,128], index: 7, kind: output, shape index: {}]
  %s8 = sld [smem:[#allocation0]]
  $region65: #{tpu_custom_call.1} parent=0
    _
  %s10 = ssub.s32 1, %s8
  %s11 = scalar_select 0, %s10, %s8
  $region1: #{tpu_custom_call.1} parent=0
    #allocation2 [shape = 'u8[131072]{0}', space=vmem, size = 0x20000, scoped, tag = 'input window, operand 3, single buffered']
    #allocation3 [shape = 's32[2]{0}', space=sflag, size = 0x8, scoped, tag = 'scoped memory for tpu_custom_call.1']
    #allocation4 [shape = 's32[2]{0}', space=sflag, size = 0x8, scoped, tag = 'scoped memory for tpu_custom_call.1']
    #allocation5 [shape = 'u8[131072]{0}', space=vmem, size = 0x20000, scoped, tag = 'output window, operand 0']
    %12 = vsyncpa [#allocation3], 0
    %13 = vsyncpa [#allocation4], 0
    %s14 = scalar_lea.sflag [#allocation4], 1
    %15 = vsyncpa %s14, 0
    loop: start=0, step=1, limit=4
    $region2: #{tpu_custom_call.1} parent=1 // loop_pre_header
      _
    $region3: #{tpu_custom_call.1} parent=1 // loop_header
      %s17 = sphi 0, %s21
      %p18 = scmp.ge.s32.totalorder %s17, 4
      %s27 = sphi 0, %s29
      %s30 = sphi 0, %s27
      %s31 = sphi 0, %s30
      %s47 = sphi 0, %s31
      %s51 = sphi 0, %s51
      %s53 = sphi 0, %s51
      %s54 = sphi 0, %s53
      %s68 = sphi 0, %s54
      %s72 = sphi 0, %s72
      %s74 = sphi 0, %s72
      %s75 = sphi 0, %s74
      %s89 = sphi 0, %s75
      %s93 = sphi 0, %s93
      %s95 = sphi 0, %s93
      %s96 = sphi 0, %s95
      %s110 = sphi 0, %s96
      %s114 = sphi 0, %s114
      %s116 = sphi 0, %s114
      %s117 = sphi 0, %s116
      %s131 = sphi 0, %s117
      %s135 = sphi 0, %s135
      %s137 = sphi 0, %s135
      %s138 = sphi 0, %s137
      %s152 = sphi 0, %s138
      %s156 = sphi 0, %s156
      %s158 = sphi 0, %s156
      %s159 = sphi 0, %s158
      %s173 = sphi 0, %s159
      %s179 = sphi 0, %s181
      %s182 = sphi 0, %s179
      %s183 = sphi 0, %s182
      %s199 = sphi 0, %s183
    $region4: #{tpu_custom_call.1} parent=1 // loop_header_branch
      %20 = sbr.rel (%p18) target = $region8
    $region5: #{tpu_custom_call.1} parent=1 // loop_body
      %s22 = ssub.s32 %s17, 1
      %s23 = ssub.s32 %s17, 2
      %s24 = sadd.s32 %s17, 1
      %s25 = ssub.s32 %s17, %s24
      %p26 = scmp.eq.s32.totalorder %s25, 0
      %s28 = sadd.s32 %s27, 1
      %s29 = scalar_select %p26, %s27, %s28
      %p32 = pneg %p26
      %p33 = scmp.eq.s32.totalorder %s17, 1
      %p34 = por %p32, %p33
      %p35 = scmp.ne.s32.totalorder %s27, %s30
      %p36 = scmp.eq.s32.totalorder %s17, 0
      %p37 = por %p35, %p36
      %p38 = scmp.ne.s32.totalorder %s27, %s30
      %p39 = scmp.eq.s32.totalorder %s22, 1
      %p40 = por %p38, %p39
      %p41 = scmp.ne.s32.totalorder %s30, %s31
      %p42 = scmp.eq.s32.totalorder %s22, 0
      %p43 = por %p41, %p42
      %p44 = scmp.ne.s32.totalorder %s30, %s31
      %p45 = scmp.eq.s32.totalorder %s23, 1
      %p46 = por %p44, %p45
      %p48 = scmp.ne.s32.totalorder %s31, %s47
      %p49 = scmp.eq.s32.totalorder %s23, 0
      %p50 = por %p48, %p49
      %s52 = sadd.s32 %s51, 1
      %p55 = scmp.eq.s32.totalorder %s17, 1
      %p56 = scmp.ne.s32.totalorder %s51, %s53
      %p57 = scmp.eq.s32.totalorder %s17, 0
      %p58 = por %p56, %p57
      %p59 = scmp.ne.s32.totalorder %s51, %s53
      %p60 = scmp.eq.s32.totalorder %s22, 1
      %p61 = por %p59, %p60
      %p62 = scmp.ne.s32.totalorder %s53, %s54
      %p63 = scmp.eq.s32.totalorder %s22, 0
      %p64 = por %p62, %p63
      %p65 = scmp.ne.s32.totalorder %s53, %s54
      %p66 = scmp.eq.s32.totalorder %s23, 1
      %p67 = por %p65, %p66
      %p69 = scmp.ne.s32.totalorder %s54, %s68
      %p70 = scmp.eq.s32.totalorder %s23, 0
      %p71 = por %p69, %p70
      %s73 = sadd.s32 %s72, 1
      %p76 = scmp.eq.s32.totalorder %s17, 1
      %p77 = scmp.ne.s32.totalorder %s72, %s74
      %p78 = scmp.eq.s32.totalorder %s17, 0
      %p79 = por %p77, %p78
      %p80 = scmp.ne.s32.totalorder %s72, %s74
      %p81 = scmp.eq.s32.totalorder %s22, 1
      %p82 = por %p80, %p81
      %p83 = scmp.ne.s32.totalorder %s74, %s75
      %p84 = scmp.eq.s32.totalorder %s22, 0
      %p85 = por %p83, %p84
      %p86 = scmp.ne.s32.totalorder %s74, %s75
      %p87 = scmp.eq.s32.totalorder %s23, 1
      %p88 = por %p86, %p87
      %p90 = scmp.ne.s32.totalorder %s75, %s89
      %p91 = scmp.eq.s32.totalorder %s23, 0
      %p92 = por %p90, %p91
      %s94 = sadd.s32 %s93, 1
      %p97 = scmp.eq.s32.totalorder %s17, 1
      %p98 = scmp.ne.s32.totalorder %s93, %s95
      %p99 = scmp.eq.s32.totalorder %s17, 0
      %p100 = por %p98, %p99
      %p101 = scmp.ne.s32.totalorder %s93, %s95
      %p102 = scmp.eq.s32.totalorder %s22, 1
      %p103 = por %p101, %p102
      %p104 = scmp.ne.s32.totalorder %s95, %s96
      %p105 = scmp.eq.s32.totalorder %s22, 0
      %p106 = por %p104, %p105
      %p107 = scmp.ne.s32.totalorder %s95, %s96
      %p108 = scmp.eq.s32.totalorder %s23, 1
      %p109 = por %p107, %p108
      %p111 = scmp.ne.s32.totalorder %s96, %s110
      %p112 = scmp.eq.s32.totalorder %s23, 0
      %p113 = por %p111, %p112
      %s115 = sadd.s32 %s114, 1
      %p118 = scmp.eq.s32.totalorder %s17, 1
      %p119 = scmp.ne.s32.totalorder %s114, %s116
      %p120 = scmp.eq.s32.totalorder %s17, 0
      %p121 = por %p119, %p120
      %p122 = scmp.ne.s32.totalorder %s114, %s116
      %p123 = scmp.eq.s32.totalorder %s22, 1
      %p124 = por %p122, %p123
      %p125 = scmp.ne.s32.totalorder %s116, %s117
      %p126 = scmp.eq.s32.totalorder %s22, 0
      %p127 = por %p125, %p126
      %p128 = scmp.ne.s32.totalorder %s116, %s117
      %p129 = scmp.eq.s32.totalorder %s23, 1
      %p130 = por %p128, %p129
      %p132 = scmp.ne.s32.totalorder %s117, %s131
      %p133 = scmp.eq.s32.totalorder %s23, 0
      %p134 = por %p132, %p133
      %s136 = sadd.s32 %s135, 1
      %p139 = scmp.eq.s32.totalorder %s17, 1
      %p140 = scmp.ne.s32.totalorder %s135, %s137
      %p141 = scmp.eq.s32.totalorder %s17, 0
      %p142 = por %p140, %p141
      %p143 = scmp.ne.s32.totalorder %s135, %s137
      %p144 = scmp.eq.s32.totalorder %s22, 1
      %p145 = por %p143, %p144
      %p146 = scmp.ne.s32.totalorder %s137, %s138
      %p147 = scmp.eq.s32.totalorder %s22, 0
      %p148 = por %p146, %p147
      %p149 = scmp.ne.s32.totalorder %s137, %s138
      %p150 = scmp.eq.s32.totalorder %s23, 1
      %p151 = por %p149, %p150
      %p153 = scmp.ne.s32.totalorder %s138, %s152
      %p154 = scmp.eq.s32.totalorder %s23, 0
      %p155 = por %p153, %p154
      %s157 = sadd.s32 %s156, 1
      %p160 = scmp.eq.s32.totalorder %s17, 1
      %p161 = scmp.ne.s32.totalorder %s156, %s158
      %p162 = scmp.eq.s32.totalorder %s17, 0
      %p163 = por %p161, %p162
      %p164 = scmp.ne.s32.totalorder %s156, %s158
      %p165 = scmp.eq.s32.totalorder %s22, 1
      %p166 = por %p164, %p165
      %p167 = scmp.ne.s32.totalorder %s158, %s159
      %p168 = scmp.eq.s32.totalorder %s22, 0
      %p169 = por %p167, %p168
      %p170 = scmp.ne.s32.totalorder %s158, %s159
      %p171 = scmp.eq.s32.totalorder %s23, 1
      %p172 = por %p170, %p171
      %p174 = scmp.ne.s32.totalorder %s159, %s173
      %p175 = scmp.eq.s32.totalorder %s23, 0
      %p176 = por %p174, %p175
      %s177 = ssub.s32 %s17, %s24
      %p178 = scmp.eq.s32.totalorder %s177, 0
      %s180 = sadd.s32 %s179, 1
      %s181 = scalar_select %p178, %s179, %s180
      %p184 = pneg %p178
      %p185 = scmp.eq.s32.totalorder %s17, 1
      %p186 = por %p184, %p185
      %p187 = scmp.ne.s32.totalorder %s179, %s182
      %p188 = scmp.eq.s32.totalorder %s17, 0
      %p189 = por %p187, %p188
      %p190 = scmp.ne.s32.totalorder %s179, %s182
      %p191 = scmp.eq.s32.totalorder %s22, 1
      %p192 = por %p190, %p191
      %p193 = scmp.ne.s32.totalorder %s182, %s183
      %p194 = scmp.eq.s32.totalorder %s22, 0
      %p195 = por %p193, %p194
      %p196 = scmp.ne.s32.totalorder %s182, %s183
      %p197 = scmp.eq.s32.totalorder %s23, 1
      %p198 = por %p196, %p197
      %p200 = scmp.ne.s32.totalorder %s183, %s199
      %p201 = scmp.eq.s32.totalorder %s23, 0
      %p202 = por %p200, %p201
      %p203 = scmp.le.s32.totalorder 1, %s17
      %p204 = scmp.lt.s32.totalorder %s17, 3
      %p205 = pnand %p203, %p204
      %p206 = pneg %p205
      // Predicated region
      $region9: #{tpu_custom_call.1} parent=5 // pred_check
        _
      $region10: #{tpu_custom_call.1} parent=5 // pred_check_branch
        %208 = sbr.rel (%p205) target = $region12
      $region11: #{tpu_custom_call.1} parent=5 // pred_region
        %s209 = ssub.s32 %s17, 1
        // Predicated region
        $region13: #{tpu_custom_call.1} parent=11 // pred_check
          %p210 = pneg %p64
        $region14: #{tpu_custom_call.1} parent=11 // pred_check_branch
          %212 = sbr.rel (%p210) target = $region16
        $region15: #{tpu_custom_call.1} parent=11 // pred_region
          _
        $region16: #{tpu_custom_call.1} parent=11 // pred_fallthru
          _
        // Predicated region
        $region17: #{tpu_custom_call.1} parent=11 // pred_check
          %p213 = pneg %p85
        $region18: #{tpu_custom_call.1} parent=11 // pred_check_branch
          %215 = sbr.rel (%p213) target = $region20
        $region19: #{tpu_custom_call.1} parent=11 // pred_region
          _
        $region20: #{tpu_custom_call.1} parent=11 // pred_fallthru
          _
        // Predicated region
        $region21: #{tpu_custom_call.1} parent=11 // pred_check
          %p216 = pneg %p106
        $region22: #{tpu_custom_call.1} parent=11 // pred_check_branch
          %218 = sbr.rel (%p216) target = $region24
        $region23: #{tpu_custom_call.1} parent=11 // pred_region
          %s220 = ssub.s32 4096, 4096
          %221 = vsyncadd [#allocation3], %s220
          %s222 = sshll.u32 [#allocation2], 4
          %s223 = int_to_ptr.vmem [resolvable:$true] %s222
          %228 = dma.hbm_to_vmem [thread:$0]  %s3, 4096, %s223, [#allocation3], 128, 128, 8
        $region24: #{tpu_custom_call.1} parent=11 // pred_fallthru
          _
        // Predicated region
        $region25: #{tpu_custom_call.1} parent=11 // pred_check
          %p229 = pneg %p127
        $region26: #{tpu_custom_call.1} parent=11 // pred_check_branch
          %231 = sbr.rel (%p229) target = $region28
        $region27: #{tpu_custom_call.1} parent=11 // pred_region
          _
        $region28: #{tpu_custom_call.1} parent=11 // pred_fallthru
          _
        // Predicated region
        $region29: #{tpu_custom_call.1} parent=11 // pred_check
          %p232 = pneg %p148
        $region30: #{tpu_custom_call.1} parent=11 // pred_check_branch
          %234 = sbr.rel (%p232) target = $region32
        $region31: #{tpu_custom_call.1} parent=11 // pred_region
          _
        $region32: #{tpu_custom_call.1} parent=11 // pred_fallthru
          _
        // Predicated region
        $region33: #{tpu_custom_call.1} parent=11 // pred_check
          %p235 = pneg %p169
        $region34: #{tpu_custom_call.1} parent=11 // pred_check_branch
          %237 = sbr.rel (%p235) target = $region36
        $region35: #{tpu_custom_call.1} parent=11 // pred_region
          _
        $region36: #{tpu_custom_call.1} parent=11 // pred_fallthru
          _
      $region12: #{tpu_custom_call.1} parent=5 // pred_fallthru
        _
      %p238 = scmp.lt.s32.totalorder %s17, 2
      // Predicated region
      $region37: #{tpu_custom_call.1} parent=5 // pred_check
        %p239 = pneg %p238
      $region38: #{tpu_custom_call.1} parent=5 // pred_check_branch
        %241 = sbr.rel (%p239) target = $region40
      $region39: #{tpu_custom_call.1} parent=5 // pred_region
        // Predicated region
        $region41: #{tpu_custom_call.1} parent=39 // pred_check
          %p242 = pneg %p37
        $region42: #{tpu_custom_call.1} parent=39 // pred_check_branch
          %244 = sbr.rel (%p242) target = $region44
        $region43: #{tpu_custom_call.1} parent=39 // pred_region
          %s245 = smul.u32 16, %s17
          %p246 = scmp.lt.s32.totalorder %s245, 31
          %s247 = scalar_select %p246, %s245, 31
          %s248 = smul.addr %s247, 4
          %s249 = scalar_lea.vmem %s0, %s248
          %s250 = smul.u32 16, %s17
        $region44: #{tpu_custom_call.1} parent=39 // pred_fallthru
          _
      $region40: #{tpu_custom_call.1} parent=5 // pred_fallthru
        _
      %p251 = scmp.le.s32.totalorder 1, %s17
      %p252 = scmp.lt.s32.totalorder %s17, 3
      %p253 = pnand %p251, %p252
      %p254 = pneg %p253
      // Predicated region
      $region45: #{tpu_custom_call.1} parent=5 // pred_check
        _
      $region46: #{tpu_custom_call.1} parent=5 // pred_check_branch
        %256 = sbr.rel (%p253) target = $region48
      $region47: #{tpu_custom_call.1} parent=5 // pred_region
        %s257 = ssub.s32 %s17, 1
        // Predicated region
        $region49: #{tpu_custom_call.1} parent=47 // pred_check
          %p258 = pneg %p106
        $region50: #{tpu_custom_call.1} parent=47 // pred_check_branch
          %260 = sbr.rel (%p258) target = $region52
        $region51: #{tpu_custom_call.1} parent=47 // pred_region
          %261 = dma.done [#allocation3], 4096
        $region52: #{tpu_custom_call.1} parent=47 // pred_fallthru
          _
        %s262 = smul.u32 16, %s22
        %p263 = scmp.lt.s32.totalorder %s262, 31
        %s264 = scalar_select %p263, %s262, 31
        %s265 = smul.addr %s264, 4
        %s266 = scalar_lea.vmem %s0, %s265
        %p267 = pneg %p43
        %p268 = pneg %p40
        %p269 = pneg %p64
        %p270 = pneg %p61
        %p271 = pneg %p85
        %p272 = pneg %p82
        %p273 = pneg %p106
        %p274 = pneg %p103
        %p275 = pneg %p127
        %p276 = pneg %p124
        %p277 = pneg %p148
        %p278 = pneg %p145
        %p279 = pneg %p169
        %p280 = pneg %p166
        %p281 = pneg %p195
        %p282 = pneg %p192
        %s283 = sand.u32 %s182, 1
        %s284 = scalar_lea.sflag [#allocation4], %s283
        %s285 = sand.u32 %s182, 1
        %s286 = smul.addr %s285, 128
        %s287 = scalar_lea.vmem [#allocation5], %s286
        %s288 = smul.u32 16, %s22
        %p289 = scmp.lt.s32.totalorder %s288, 31
        %s290 = scalar_select %p289, %s288, 31
        %s291 = smul.addr %s290, 4
        %s292 = scalar_lea.vmem %s0, %s291
        %s293 = smul.u32 16, %s22
        %s294 = smul.u32 16, %s22
        %v296 = vld [vmem:[%s292] sm:$0xf]
        %v297 = vld [vmem:[%s292 + $0x4] sm:$0xf]
        %v298 = vld [vmem:[%s292 + $0x8] sm:$0xf]
        %v299 = vld [vmem:[%s292 + $0xc] sm:$0xf]
        %v300 = vld [vmem:[%s292 + $0x10] sm:$0xf]
        %v301 = vld [vmem:[%s292 + $0x14] sm:$0xf]
        %v302 = vld [vmem:[%s292 + $0x18] sm:$0xf]
        %v303 = vld [vmem:[%s292 + $0x1c] sm:$0xf]
        %v304 = vld [vmem:[%s292 + $0x20] sm:$0xf]
        %v305 = vld [vmem:[%s292 + $0x24] sm:$0xf]
        %v306 = vld [vmem:[%s292 + $0x28] sm:$0xf]
        %v307 = vld [vmem:[%s292 + $0x2c] sm:$0xf]
        %v308 = vld [vmem:[%s292 + $0x30] sm:$0xf]
        %v309 = vld [vmem:[%s292 + $0x34] sm:$0xf]
        %v310 = vld [vmem:[%s292 + $0x38] sm:$0xf]
        %v311 = vld [vmem:[%s292 + $0x3c] sm:$0xf]
        %v312 = vld [vmem:[%s1] sm:$0xff]
        %v313 = vld [vmem:[%s1 + $0x8] sm:$0xff]
        %v314 = vld [vmem:[%s2] sm:$0x3]
        %v316 = vlaneseq
        %v317 = vshrl.u32 %v316, 7
        %v318 = vsub.s32 0, %v317
        %v319 = vrot.slane %v314, %v318
        %v320 = vlaneseq
        %v321 = vshrl.u32 %v320, 7
        %v322 = vsub.s32 1, %v321
        %v323 = vrot.slane %v314, %v322
        %v342 = vunpack.c.l.b16 %v296
        %v343 = vunpack.c.l.b16 %v297
        %v344 = vunpack.c.l.b16 %v298
        %v345 = vunpack.c.l.b16 %v299
        %v346 = vunpack.c.l.b16 %v300
        %v347 = vunpack.c.l.b16 %v301
        %v348 = vunpack.c.l.b16 %v302
        %v349 = vunpack.c.l.b16 %v303
        %v350 = vunpack.c.l.b16 %v304
        %v351 = vunpack.c.l.b16 %v305
        %v352 = vunpack.c.l.b16 %v306
        %v353 = vunpack.c.l.b16 %v307
        %v354 = vunpack.c.l.b16 %v308
        %v355 = vunpack.c.l.b16 %v309
        %v356 = vunpack.c.l.b16 %v310
        %v357 = vunpack.c.l.b16 %v311
        %v358 = vpack.c.b16 %v343, %v342
        %v359 = vpack.c.b16 %v345, %v344
        %v360 = vpack.c.b16 %v347, %v346
        %v361 = vpack.c.b16 %v349, %v348
        %v362 = vpack.c.b16 %v351, %v350
        %v363 = vpack.c.b16 %v353, %v352
        %v364 = vpack.c.b16 %v355, %v354
        %v365 = vpack.c.b16 %v357, %v356
        %v368 = vunpack.c.l.b16 %v312
        %v369 = vunpack.c.h.b16 %v312
        %v370 = vunpack.c.l.b16 %v313
        %v371 = vunpack.c.h.b16 %v313
        %v372 = vpack.c.b16 %v370, %v368
        %v373 = vpack.c.b16 %v371, %v369
        %vm376 = vcmask 130048
        %v378 = vsel %vm376, %v358, 0
        %v381 = vsel %vm376, %v359, 0
        %v384 = vsel %vm376, %v360, 0
        %v387 = vsel %vm376, %v361, 0
        %v390 = vsel %vm376, %v362, 0
        %v393 = vsel %vm376, %v363, 0
        %v396 = vsel %vm376, %v364, 0
        %v399 = vsel %vm376, %v365, 0
        %401 = vmatprep.subr.bf16.mxu0 %v373
        %402 = vmatpush1.bf16.msra.mxu0 %v372
        %403 = vmatprep.subr.bf16.mxu0 0
        %404 = vmatpush1.bf16.msra.mxu0 0
        %405 = vmatprep.subr.bf16.mxu0 0
        %406 = vmatpush1.bf16.msra.mxu0 0
        %407 = vmatprep.subr.bf16.mxu0 0
        %408 = vmatpush1.bf16.msra.mxu0 0
        %409 = vmatprep.subr.bf16.mxu0 0
        %410 = vmatpush1.bf16.msra.mxu0 0
        %411 = vmatprep.subr.bf16.mxu0 0
        %412 = vmatpush1.bf16.msra.mxu0 0
        %413 = vmatprep.subr.bf16.mxu0 0
        %414 = vmatpush1.bf16.msra.mxu0 0
        %415 = vmatprep.subr.bf16.mxu0 0
        %416 = vmatpush1.bf16.msra.mxu0 0
        %417 = vmatprep.subr.bf16.mxu0 0
        %418 = vmatpush1.bf16.msra.mxu0 0
        %419 = vmatprep.subr.bf16.mxu0 0
        %420 = vmatpush1.bf16.msra.mxu0 0
        %421 = vmatprep.subr.bf16.mxu0 0
        %422 = vmatpush1.bf16.msra.mxu0 0
        %423 = vmatprep.subr.bf16.mxu0 0
        %424 = vmatpush1.bf16.msra.mxu0 0
        %425 = vmatprep.subr.bf16.mxu0 0
        %426 = vmatpush1.bf16.msra.mxu0 0
        %427 = vmatprep.subr.bf16.mxu0 0
        %428 = vmatpush1.bf16.msra.mxu0 0
        %429 = vmatprep.subr.bf16.mxu0 0
        %430 = vmatpush1.bf16.msra.mxu0 0
        %431 = vmatprep.subr.bf16.mxu0 0
        %432 = vmatpush1.bf16.msra.mxu0 0
        %433 = vmatprep.mubr.bf16.mxu0 0
        %434 = vmatmul.mubr.bf16.gmra.mrb[0].mxu0 %v378
        %v435 = vpop.f32.mrb[0].mxu0
        %v436 = vadd.f32 %v319, %v435
        %v437 = vpop.f32.mrb[0].mxu0
        %v438 = vadd.f32 %v323, %v437
        %v439 = vpop.f32.mrb[0].mxu0
        %v440 = vadd.f32 %v319, %v439
        %v441 = vpop.f32.mrb[0].mxu0
        %v442 = vadd.f32 %v323, %v441
        %443 = vmatprep.mubr.bf16.mxu0 0
        %444 = vmatmul.mubr.bf16.gmra.mrb[0].mxu0 %v381
        %v445 = vpop.f32.mrb[0].mxu0
        %v446 = vadd.f32 %v319, %v445
        %v447 = vpop.f32.mrb[0].mxu0
        %v448 = vadd.f32 %v323, %v447
        %v449 = vpop.f32.mrb[0].mxu0
        %v450 = vadd.f32 %v319, %v449
        %v451 = vpop.f32.mrb[0].mxu0
        %v452 = vadd.f32 %v323, %v451
        %453 = vmatprep.mubr.bf16.mxu0 0
        %454 = vmatmul.mubr.bf16.gmra.mrb[0].mxu0 %v384
        %v455 = vpop.f32.mrb[0].mxu0
        %v456 = vadd.f32 %v319, %v455
        %v457 = vpop.f32.mrb[0].mxu0
        %v458 = vadd.f32 %v323, %v457
        %v459 = vpop.f32.mrb[0].mxu0
        %v460 = vadd.f32 %v319, %v459
        %v461 = vpop.f32.mrb[0].mxu0
        %v462 = vadd.f32 %v323, %v461
        %463 = vmatprep.mubr.bf16.mxu0 0
        %464 = vmatmul.mubr.bf16.gmra.mrb[0].mxu0 %v387
        %v465 = vpop.f32.mrb[0].mxu0
        %v466 = vadd.f32 %v319, %v465
        %v467 = vpop.f32.mrb[0].mxu0
        %v468 = vadd.f32 %v323, %v467
        %v469 = vpop.f32.mrb[0].mxu0
        %v470 = vadd.f32 %v319, %v469
        %v471 = vpop.f32.mrb[0].mxu0
        %v472 = vadd.f32 %v323, %v471
        %473 = vmatprep.mubr.bf16.mxu0 0
        %474 = vmatmul.mubr.bf16.gmra.mrb[0].mxu0 %v390
        %v475 = vpop.f32.mrb[0].mxu0
        %v476 = vadd.f32 %v319, %v475
        %v477 = vpop.f32.mrb[0].mxu0
        %v478 = vadd.f32 %v323, %v477
        %v479 = vpop.f32.mrb[0].mxu0
        %v480 = vadd.f32 %v319, %v479
        %v481 = vpop.f32.mrb[0].mxu0
        %v482 = vadd.f32 %v323, %v481
        %483 = vmatprep.mubr.bf16.mxu0 0
        %484 = vmatmul.mubr.bf16.gmra.mrb[0].mxu0 %v393
        %v485 = vpop.f32.mrb[0].mxu0
        %v486 = vadd.f32 %v319, %v485
        %v487 = vpop.f32.mrb[0].mxu0
        %v488 = vadd.f32 %v323, %v487
        %v489 = vpop.f32.mrb[0].mxu0
        %v490 = vadd.f32 %v319, %v489
        %v491 = vpop.f32.mrb[0].mxu0
        %v492 = vadd.f32 %v323, %v491
        %493 = vmatprep.mubr.bf16.mxu0 0
        %494 = vmatmul.mubr.bf16.gmra.mrb[0].mxu0 %v396
        %v495 = vpop.f32.mrb[0].mxu0
        %v496 = vadd.f32 %v319, %v495
        %v497 = vpop.f32.mrb[0].mxu0
        %v498 = vadd.f32 %v323, %v497
        %v499 = vpop.f32.mrb[0].mxu0
        %v500 = vadd.f32 %v319, %v499
        %v501 = vpop.f32.mrb[0].mxu0
        %v502 = vadd.f32 %v323, %v501
        %503 = vmatprep.mubr.bf16.mxu0 0
        %504 = vmatmul.mubr.bf16.gmra.mrb[0].mxu0 %v399
        %v505 = vpop.f32.mrb[0].mxu0
        %v506 = vadd.f32 %v319, %v505
        %v507 = vpop.f32.mrb[0].mxu0
        %v508 = vadd.f32 %v323, %v507
        %v509 = vpop.f32.mrb[0].mxu0
        %v510 = vadd.f32 %v319, %v509
        %v511 = vpop.f32.mrb[0].mxu0
        %v512 = vadd.f32 %v323, %v511
        %513 = vdwg.mxu0
        %v514 = vmax.f32 %v436, 0.0
        %v515 = vmax.f32 %v438, 0.0
        %v516 = vmax.f32 %v440, 0.0
        %v517 = vmax.f32 %v442, 0.0
        %v518 = vmax.f32 %v446, 0.0
        %v519 = vmax.f32 %v448, 0.0
        %v520 = vmax.f32 %v450, 0.0
        %v521 = vmax.f32 %v452, 0.0
        %v522 = vmax.f32 %v456, 0.0
        %v523 = vmax.f32 %v458, 0.0
        %v524 = vmax.f32 %v460, 0.0
        %v525 = vmax.f32 %v462, 0.0
        %v526 = vmax.f32 %v466, 0.0
        %v527 = vmax.f32 %v468, 0.0
        %v528 = vmax.f32 %v470, 0.0
        %v529 = vmax.f32 %v472, 0.0
        %v530 = vmax.f32 %v476, 0.0
        %v531 = vmax.f32 %v478, 0.0
        %v532 = vmax.f32 %v480, 0.0
        %v533 = vmax.f32 %v482, 0.0
        %v534 = vmax.f32 %v486, 0.0
        %v535 = vmax.f32 %v488, 0.0
        %v536 = vmax.f32 %v490, 0.0
        %v537 = vmax.f32 %v492, 0.0
        %v538 = vmax.f32 %v496, 0.0
        %v539 = vmax.f32 %v498, 0.0
        %v540 = vmax.f32 %v500, 0.0
        %v541 = vmax.f32 %v502, 0.0
        %v542 = vmax.f32 %v506, 0.0
        %v543 = vmax.f32 %v508, 0.0
        %v544 = vmax.f32 %v510, 0.0
        %v545 = vmax.f32 %v512, 0.0
        %v546 = vpack.c.bf16 %v516, %v514
        %v547 = vpack.c.bf16 %v517, %v515
        %v548 = vpack.c.bf16 %v520, %v518
        %v549 = vpack.c.bf16 %v521, %v519
        %v550 = vpack.c.bf16 %v524, %v522
        %v551 = vpack.c.bf16 %v525, %v523
        %v552 = vpack.c.bf16 %v528, %v526
        %v553 = vpack.c.bf16 %v529, %v527
        %v554 = vpack.c.bf16 %v532, %v530
        %v555 = vpack.c.bf16 %v533, %v531
        %v556 = vpack.c.bf16 %v536, %v534
        %v557 = vpack.c.bf16 %v537, %v535
        %v558 = vpack.c.bf16 %v540, %v538
        %v559 = vpack.c.bf16 %v541, %v539
        %v560 = vpack.c.bf16 %v544, %v542
        %v561 = vpack.c.bf16 %v545, %v543
        %v562 = vld [vmem:[#allocation2] sm:$0xff]
        %v563 = vld [vmem:[#allocation2 + $0x8] sm:$0xff]
        %v564 = vld [vmem:[#allocation2 + $0x10] sm:$0xff]
        %v565 = vld [vmem:[#allocation2 + $0x18] sm:$0xff]
        %v566 = vld [vmem:[#allocation2 + $0x20] sm:$0xff]
        %v567 = vld [vmem:[#allocation2 + $0x28] sm:$0xff]
        %v568 = vld [vmem:[#allocation2 + $0x30] sm:$0xff]
        %v569 = vld [vmem:[#allocation2 + $0x38] sm:$0xff]
        %v570 = vld [vmem:[#allocation2 + $0x40] sm:$0xff]
        %v571 = vld [vmem:[#allocation2 + $0x48] sm:$0xff]
        %v572 = vld [vmem:[#allocation2 + $0x50] sm:$0xff]
        %v573 = vld [vmem:[#allocation2 + $0x58] sm:$0xff]
        %v574 = vld [vmem:[#allocation2 + $0x60] sm:$0xff]
        %v575 = vld [vmem:[#allocation2 + $0x68] sm:$0xff]
        %v576 = vld [vmem:[#allocation2 + $0x70] sm:$0xff]
        %v577 = vld [vmem:[#allocation2 + $0x78] sm:$0xff]
        %v578 = vld [vmem:[#allocation2 + $0x80] sm:$0xff]
        %v579 = vld [vmem:[#allocation2 + $0x88] sm:$0xff]
        %v580 = vld [vmem:[#allocation2 + $0x90] sm:$0xff]
        %v581 = vld [vmem:[#allocation2 + $0x98] sm:$0xff]
        %v582 = vld [vmem:[#allocation2 + $0xa0] sm:$0xff]
        %v583 = vld [vmem:[#allocation2 + $0xa8] sm:$0xff]
        %v584 = vld [vmem:[#allocation2 + $0xb0] sm:$0xff]
        %v585 = vld [vmem:[#allocation2 + $0xb8] sm:$0xff]
        %v586 = vld [vmem:[#allocation2 + $0xc0] sm:$0xff]
        %v587 = vld [vmem:[#allocation2 + $0xc8] sm:$0xff]
        %v588 = vld [vmem:[#allocation2 + $0xd0] sm:$0xff]
        %v589 = vld [vmem:[#allocation2 + $0xd8] sm:$0xff]
        %v590 = vld [vmem:[#allocation2 + $0xe0] sm:$0xff]
        %v591 = vld [vmem:[#allocation2 + $0xe8] sm:$0xff]
        %v592 = vld [vmem:[#allocation2 + $0xf0] sm:$0xff]
        %v593 = vld [vmem:[#allocation2 + $0xf8] sm:$0xff]
        %v594 = vld [vmem:[%s4] sm:$0x3]
        %v596 = vlaneseq
        %v597 = vshrl.u32 %v596, 7
        %v598 = vsub.s32 0, %v597
        %v599 = vrot.slane %v594, %v598
        %v600 = vlaneseq
        %v601 = vshrl.u32 %v600, 7
        %v602 = vsub.s32 1, %v601
        %v603 = vrot.slane %v594, %v602
        %v638 = vunpack.c.l.b16 %v562
        %v639 = vunpack.c.h.b16 %v562
        %v640 = vunpack.c.l.b16 %v563
        %v641 = vunpack.c.h.b16 %v563
        %v642 = vunpack.c.l.b16 %v564
        %v643 = vunpack.c.h.b16 %v564
        %v644 = vunpack.c.l.b16 %v565
        %v645 = vunpack.c.h.b16 %v565
        %v646 = vunpack.c.l.b16 %v566
        %v647 = vunpack.c.h.b16 %v566
        %v648 = vunpack.c.l.b16 %v567
        %v649 = vunpack.c.h.b16 %v567
        %v650 = vunpack.c.l.b16 %v568
        %v651 = vunpack.c.h.b16 %v568
        %v652 = vunpack.c.l.b16 %v569
        %v653 = vunpack.c.h.b16 %v569
        %v654 = vunpack.c.l.b16 %v570
        %v655 = vunpack.c.h.b16 %v570
        %v656 = vunpack.c.l.b16 %v571
        %v657 = vunpack.c.h.b16 %v571
        %v658 = vunpack.c.l.b16 %v572
        %v659 = vunpack.c.h.b16 %v572
        %v660 = vunpack.c.l.b16 %v573
        %v661 = vunpack.c.h.b16 %v573
        %v662 = vunpack.c.l.b16 %v574
        %v663 = vunpack.c.h.b16 %v574
        %v664 = vunpack.c.l.b16 %v575
        %v665 = vunpack.c.h.b16 %v575
        %v666 = vunpack.c.l.b16 %v576
        %v667 = vunpack.c.h.b16 %v576
        %v668 = vunpack.c.l.b16 %v577
        %v669 = vunpack.c.h.b16 %v577
        %v670 = vunpack.c.l.b16 %v578
        %v671 = vunpack.c.h.b16 %v578
        %v672 = vunpack.c.l.b16 %v579
        %v673 = vunpack.c.h.b16 %v579
        %v674 = vunpack.c.l.b16 %v580
        %v675 = vunpack.c.h.b16 %v580
        %v676 = vunpack.c.l.b16 %v581
        %v677 = vunpack.c.h.b16 %v581
        %v678 = vunpack.c.l.b16 %v582
        %v679 = vunpack.c.h.b16 %v582
        %v680 = vunpack.c.l.b16 %v583
        %v681 = vunpack.c.h.b16 %v583
        %v682 = vunpack.c.l.b16 %v584
        %v683 = vunpack.c.h.b16 %v584
        %v684 = vunpack.c.l.b16 %v585
        %v685 = vunpack.c.h.b16 %v585
        %v686 = vunpack.c.l.b16 %v586
        %v687 = vunpack.c.h.b16 %v586
        %v688 = vunpack.c.l.b16 %v587
        %v689 = vunpack.c.h.b16 %v587
        %v690 = vunpack.c.l.b16 %v588
        %v691 = vunpack.c.h.b16 %v588
        %v692 = vunpack.c.l.b16 %v589
        %v693 = vunpack.c.h.b16 %v589
        %v694 = vunpack.c.l.b16 %v590
        %v695 = vunpack.c.h.b16 %v590
        %v696 = vunpack.c.l.b16 %v591
        %v697 = vunpack.c.h.b16 %v591
        %v698 = vunpack.c.l.b16 %v592
        %v699 = vunpack.c.h.b16 %v592
        %v700 = vunpack.c.l.b16 %v593
        %v701 = vunpack.c.h.b16 %v593
        %v702 = vpack.c.b16 %v640, %v638
        %v703 = vpack.c.b16 %v641, %v639
        %v704 = vpack.c.b16 %v644, %v642
        %v705 = vpack.c.b16 %v645, %v643
        %v706 = vpack.c.b16 %v648, %v646
        %v707 = vpack.c.b16 %v649, %v647
        %v708 = vpack.c.b16 %v652, %v650
        %v709 = vpack.c.b16 %v653, %v651
        %v710 = vpack.c.b16 %v656, %v654
        %v711 = vpack.c.b16 %v657, %v655
        %v712 = vpack.c.b16 %v660, %v658
        %v713 = vpack.c.b16 %v661, %v659
        %v714 = vpack.c.b16 %v664, %v662
        %v715 = vpack.c.b16 %v665, %v663
        %v716 = vpack.c.b16 %v668, %v666
        %v717 = vpack.c.b16 %v669, %v667
        %v718 = vpack.c.b16 %v672, %v670
        %v719 = vpack.c.b16 %v673, %v671
        %v720 = vpack.c.b16 %v676, %v674
        %v721 = vpack.c.b16 %v677, %v675
        %v722 = vpack.c.b16 %v680, %v678
        %v723 = vpack.c.b16 %v681, %v679
        %v724 = vpack.c.b16 %v684, %v682
        %v725 = vpack.c.b16 %v685, %v683
        %v726 = vpack.c.b16 %v688, %v686
        %v727 = vpack.c.b16 %v689, %v687
        %v728 = vpack.c.b16 %v692, %v690
        %v729 = vpack.c.b16 %v693, %v691
        %v730 = vpack.c.b16 %v696, %v694
        %v731 = vpack.c.b16 %v697, %v695
        %v732 = vpack.c.b16 %v700, %v698
        %v733 = vpack.c.b16 %v701, %v699
        %766 = vmatprep.subr.bf16.mxu0 %v703
        %767 = vmatpush1.bf16.msra.mxu0 %v702
        %768 = vmatprep.subr.bf16.mxu0 %v705
        %769 = vmatpush1.bf16.msra.mxu0 %v704
        %770 = vmatprep.subr.bf16.mxu0 %v707
        %771 = vmatpush1.bf16.msra.mxu0 %v706
        %772 = vmatprep.subr.bf16.mxu0 %v709
        %773 = vmatpush1.bf16.msra.mxu0 %v708
        %774 = vmatprep.subr.bf16.mxu0 %v711
        %775 = vmatpush1.bf16.msra.mxu0 %v710
        %776 = vmatprep.subr.bf16.mxu0 %v713
        %777 = vmatpush1.bf16.msra.mxu0 %v712
        %778 = vmatprep.subr.bf16.mxu0 %v715
        %779 = vmatpush1.bf16.msra.mxu0 %v714
        %780 = vmatprep.subr.bf16.mxu0 %v717
        %781 = vmatpush1.bf16.msra.mxu0 %v716
        %782 = vmatprep.subr.bf16.mxu0 %v719
        %783 = vmatpush1.bf16.msra.mxu0 %v718
        %784 = vmatprep.subr.bf16.mxu0 %v721
        %785 = vmatpush1.bf16.msra.mxu0 %v720
        %786 = vmatprep.subr.bf16.mxu0 %v723
        %787 = vmatpush1.bf16.msra.mxu0 %v722
        %788 = vmatprep.subr.bf16.mxu0 %v725
        %789 = vmatpush1.bf16.msra.mxu0 %v724
        %790 = vmatprep.subr.bf16.mxu0 %v727
        %791 = vmatpush1.bf16.msra.mxu0 %v726
        %792 = vmatprep.subr.bf16.mxu0 %v729
        %793 = vmatpush1.bf16.msra.mxu0 %v728
        %794 = vmatprep.subr.bf16.mxu0 %v731
        %795 = vmatpush1.bf16.msra.mxu0 %v730
        %796 = vmatprep.subr.bf16.mxu0 %v733
        %797 = vmatpush1.bf16.msra.mxu0 %v732
        %798 = vmatprep.mubr.bf16.mxu0 %v547
        %799 = vmatmul.mubr.bf16.gmra.mrb[0].mxu0 %v546
        %v800 = vpop.f32.mrb[0].mxu0
        %v801 = vadd.f32 %v599, %v800
        %v802 = vpop.f32.mrb[0].mxu0
        %v803 = vadd.f32 %v603, %v802
        %v804 = vpop.f32.mrb[0].mxu0
        %v805 = vadd.f32 %v599, %v804
        %v806 = vpop.f32.mrb[0].mxu0
        %v807 = vadd.f32 %v603, %v806
        %808 = vmatprep.mubr.bf16.mxu0 %v549
        %809 = vmatmul.mubr.bf16.gmra.mrb[0].mxu0 %v548
        %v810 = vpop.f32.mrb[0].mxu0
        %v811 = vadd.f32 %v599, %v810
        %v812 = vpop.f32.mrb[0].mxu0
        %v813 = vadd.f32 %v603, %v812
        %v814 = vpop.f32.mrb[0].mxu0
        %v815 = vadd.f32 %v599, %v814
        %v816 = vpop.f32.mrb[0].mxu0
        %v817 = vadd.f32 %v603, %v816
        %818 = vmatprep.mubr.bf16.mxu0 %v551
        %819 = vmatmul.mubr.bf16.gmra.mrb[0].mxu0 %v550
        %v820 = vpop.f32.mrb[0].mxu0
        %v821 = vadd.f32 %v599, %v820
        %v822 = vpop.f32.mrb[0].mxu0
        %v823 = vadd.f32 %v603, %v822
        %v824 = vpop.f32.mrb[0].mxu0
        %v825 = vadd.f32 %v599, %v824
        %v826 = vpop.f32.mrb[0].mxu0
        %v827 = vadd.f32 %v603, %v826
        %828 = vmatprep.mubr.bf16.mxu0 %v553
        %829 = vmatmul.mubr.bf16.gmra.mrb[0].mxu0 %v552
        %v830 = vpop.f32.mrb[0].mxu0
        %v831 = vadd.f32 %v599, %v830
        %v832 = vpop.f32.mrb[0].mxu0
        %v833 = vadd.f32 %v603, %v832
        %v834 = vpop.f32.mrb[0].mxu0
        %v835 = vadd.f32 %v599, %v834
        %v836 = vpop.f32.mrb[0].mxu0
        %v837 = vadd.f32 %v603, %v836
        %838 = vmatprep.mubr.bf16.mxu0 %v555
        %839 = vmatmul.mubr.bf16.gmra.mrb[0].mxu0 %v554
        %v840 = vpop.f32.mrb[0].mxu0
        %v841 = vadd.f32 %v599, %v840
        %v842 = vpop.f32.mrb[0].mxu0
        %v843 = vadd.f32 %v603, %v842
        %v844 = vpop.f32.mrb[0].mxu0
        %v845 = vadd.f32 %v599, %v844
        %v846 = vpop.f32.mrb[0].mxu0
        %v847 = vadd.f32 %v603, %v846
        %848 = vmatprep.mubr.bf16.mxu0 %v557
        %849 = vmatmul.mubr.bf16.gmra.mrb[0].mxu0 %v556
        %v850 = vpop.f32.mrb[0].mxu0
        %v851 = vadd.f32 %v599, %v850
        %v852 = vpop.f32.mrb[0].mxu0
        %v853 = vadd.f32 %v603, %v852
        %v854 = vpop.f32.mrb[0].mxu0
        %v855 = vadd.f32 %v599, %v854
        %v856 = vpop.f32.mrb[0].mxu0
        %v857 = vadd.f32 %v603, %v856
        %858 = vmatprep.mubr.bf16.mxu0 %v559
        %859 = vmatmul.mubr.bf16.gmra.mrb[0].mxu0 %v558
        %v860 = vpop.f32.mrb[0].mxu0
        %v861 = vadd.f32 %v599, %v860
        %v862 = vpop.f32.mrb[0].mxu0
        %v863 = vadd.f32 %v603, %v862
        %v864 = vpop.f32.mrb[0].mxu0
        %v865 = vadd.f32 %v599, %v864
        %v866 = vpop.f32.mrb[0].mxu0
        %v867 = vadd.f32 %v603, %v866
        %868 = vmatprep.mubr.bf16.mxu0 %v561
        %869 = vmatmul.mubr.bf16.gmra.mrb[0].mxu0 %v560
        %v870 = vpop.f32.mrb[0].mxu0
        %v871 = vadd.f32 %v599, %v870
        %v872 = vpop.f32.mrb[0].mxu0
        %v873 = vadd.f32 %v603, %v872
        %v874 = vpop.f32.mrb[0].mxu0
        %v875 = vadd.f32 %v599, %v874
        %v876 = vpop.f32.mrb[0].mxu0
        %v877 = vadd.f32 %v603, %v876
        %878 = vdwg.mxu0
        %v879 = vmax.f32 %v801, 0.0
        %v880 = vmax.f32 %v803, 0.0
        %v881 = vmax.f32 %v805, 0.0
        %v882 = vmax.f32 %v807, 0.0
        %v883 = vmax.f32 %v811, 0.0
        %v884 = vmax.f32 %v813, 0.0
        %v885 = vmax.f32 %v815, 0.0
        %v886 = vmax.f32 %v817, 0.0
        %v887 = vmax.f32 %v821, 0.0
        %v888 = vmax.f32 %v823, 0.0
        %v889 = vmax.f32 %v825, 0.0
        %v890 = vmax.f32 %v827, 0.0
        %v891 = vmax.f32 %v831, 0.0
        %v892 = vmax.f32 %v833, 0.0
        %v893 = vmax.f32 %v835, 0.0
        %v894 = vmax.f32 %v837, 0.0
        %v895 = vmax.f32 %v841, 0.0
        %v896 = vmax.f32 %v843, 0.0
        %v897 = vmax.f32 %v845, 0.0
        %v898 = vmax.f32 %v847, 0.0
        %v899 = vmax.f32 %v851, 0.0
        %v900 = vmax.f32 %v853, 0.0
        %v901 = vmax.f32 %v855, 0.0
        %v902 = vmax.f32 %v857, 0.0
        %v903 = vmax.f32 %v861, 0.0
        %v904 = vmax.f32 %v863, 0.0
        %v905 = vmax.f32 %v865, 0.0
        %v906 = vmax.f32 %v867, 0.0
        %v907 = vmax.f32 %v871, 0.0
        %v908 = vmax.f32 %v873, 0.0
        %v909 = vmax.f32 %v875, 0.0
        %v910 = vmax.f32 %v877, 0.0
        %v911 = vpack.c.bf16 %v881, %v879
        %v912 = vpack.c.bf16 %v882, %v880
        %v913 = vpack.c.bf16 %v885, %v883
        %v914 = vpack.c.bf16 %v886, %v884
        %v915 = vpack.c.bf16 %v889, %v887
        %v916 = vpack.c.bf16 %v890, %v888
        %v917 = vpack.c.bf16 %v893, %v891
        %v918 = vpack.c.bf16 %v894, %v892
        %v919 = vpack.c.bf16 %v897, %v895
        %v920 = vpack.c.bf16 %v898, %v896
        %v921 = vpack.c.bf16 %v901, %v899
        %v922 = vpack.c.bf16 %v902, %v900
        %v923 = vpack.c.bf16 %v905, %v903
        %v924 = vpack.c.bf16 %v906, %v904
        %v925 = vpack.c.bf16 %v909, %v907
        %v926 = vpack.c.bf16 %v910, %v908
        %v927 = vld [vmem:[%s5] sm:$0xf]
        %v928 = vld [vmem:[%s5 + $0x4] sm:$0xf]
        %v929 = vld [vmem:[%s5 + $0x8] sm:$0xf]
        %v930 = vld [vmem:[%s5 + $0xc] sm:$0xf]
        %v931 = vld [vmem:[%s5 + $0x10] sm:$0xf]
        %v932 = vld [vmem:[%s5 + $0x14] sm:$0xf]
        %v933 = vld [vmem:[%s5 + $0x18] sm:$0xf]
        %v934 = vld [vmem:[%s5 + $0x1c] sm:$0xf]
        %v935 = vld [vmem:[%s5 + $0x20] sm:$0xf]
        %v936 = vld [vmem:[%s5 + $0x24] sm:$0xf]
        %v937 = vld [vmem:[%s5 + $0x28] sm:$0xf]
        %v938 = vld [vmem:[%s5 + $0x2c] sm:$0xf]
        %v939 = vld [vmem:[%s5 + $0x30] sm:$0xf]
        %v940 = vld [vmem:[%s5 + $0x34] sm:$0xf]
        %v941 = vld [vmem:[%s5 + $0x38] sm:$0xf]
        %v942 = vld [vmem:[%s5 + $0x3c] sm:$0xf]
        %v943 = vld [vmem:[%s5 + $0x40] sm:$0xf]
        %v944 = vld [vmem:[%s5 + $0x44] sm:$0xf]
        %v945 = vld [vmem:[%s5 + $0x48] sm:$0xf]
        %v946 = vld [vmem:[%s5 + $0x4c] sm:$0xf]
        %v947 = vld [vmem:[%s5 + $0x50] sm:$0xf]
        %v948 = vld [vmem:[%s5 + $0x54] sm:$0xf]
        %v949 = vld [vmem:[%s5 + $0x58] sm:$0xf]
        %v950 = vld [vmem:[%s5 + $0x5c] sm:$0xf]
        %v951 = vld [vmem:[%s5 + $0x60] sm:$0xf]
        %v952 = vld [vmem:[%s5 + $0x64] sm:$0xf]
        %v953 = vld [vmem:[%s5 + $0x68] sm:$0xf]
        %v954 = vld [vmem:[%s5 + $0x6c] sm:$0xf]
        %v955 = vld [vmem:[%s5 + $0x70] sm:$0xf]
        %v956 = vld [vmem:[%s5 + $0x74] sm:$0xf]
        %v957 = vld [vmem:[%s5 + $0x78] sm:$0xf]
        %v958 = vld [vmem:[%s5 + $0x7c] sm:$0xf]
        %v959 = vld [vmem:[%s6] sm:$0x1]
        %v961 = vlaneseq
        %v962 = vshrl.u32 %v961, 7
        %v963 = vsub.s32 0, %v962
        %v964 = vrot.slane %v959, %v963
        %v998 = vunpack.c.l.b16 %v927
        %v999 = vunpack.c.l.b16 %v928
        %v1000 = vunpack.c.l.b16 %v929
        %v1001 = vunpack.c.l.b16 %v930
        %v1002 = vunpack.c.l.b16 %v931
        %v1003 = vunpack.c.l.b16 %v932
        %v1004 = vunpack.c.l.b16 %v933
        %v1005 = vunpack.c.l.b16 %v934
        %v1006 = vunpack.c.l.b16 %v935
        %v1007 = vunpack.c.l.b16 %v936
        %v1008 = vunpack.c.l.b16 %v937
        %v1009 = vunpack.c.l.b16 %v938
        %v1010 = vunpack.c.l.b16 %v939
        %v1011 = vunpack.c.l.b16 %v940
        %v1012 = vunpack.c.l.b16 %v941
        %v1013 = vunpack.c.l.b16 %v942
        %v1014 = vunpack.c.l.b16 %v943
        %v1015 = vunpack.c.l.b16 %v944
        %v1016 = vunpack.c.l.b16 %v945
        %v1017 = vunpack.c.l.b16 %v946
        %v1018 = vunpack.c.l.b16 %v947
        %v1019 = vunpack.c.l.b16 %v948
        %v1020 = vunpack.c.l.b16 %v949
        %v1021 = vunpack.c.l.b16 %v950
        %v1022 = vunpack.c.l.b16 %v951
        %v1023 = vunpack.c.l.b16 %v952
        %v1024 = vunpack.c.l.b16 %v953
        %v1025 = vunpack.c.l.b16 %v954
        %v1026 = vunpack.c.l.b16 %v955
        %v1027 = vunpack.c.l.b16 %v956
        %v1028 = vunpack.c.l.b16 %v957
        %v1029 = vunpack.c.l.b16 %v958
        %v1030 = vpack.c.b16 %v999, %v998
        %v1031 = vpack.c.b16 %v1001, %v1000
        %v1032 = vpack.c.b16 %v1003, %v1002
        %v1033 = vpack.c.b16 %v1005, %v1004
        %v1034 = vpack.c.b16 %v1007, %v1006
        %v1035 = vpack.c.b16 %v1009, %v1008
        %v1036 = vpack.c.b16 %v1011, %v1010
        %v1037 = vpack.c.b16 %v1013, %v1012
        %v1038 = vpack.c.b16 %v1015, %v1014
        %v1039 = vpack.c.b16 %v1017, %v1016
        %v1040 = vpack.c.b16 %v1019, %v1018
        %v1041 = vpack.c.b16 %v1021, %v1020
        %v1042 = vpack.c.b16 %v1023, %v1022
        %v1043 = vpack.c.b16 %v1025, %v1024
        %v1044 = vpack.c.b16 %v1027, %v1026
        %v1045 = vpack.c.b16 %v1029, %v1028
        %1062 = vmatprep.subr.bf16.mxu0 0
        %1063 = vmatpush1.bf16.msra.mxu0 %v1030
        %1064 = vmatprep.subr.bf16.mxu0 0
        %1065 = vmatpush1.bf16.msra.mxu0 %v1031
        %1066 = vmatprep.subr.bf16.mxu0 0
        %1067 = vmatpush1.bf16.msra.mxu0 %v1032
        %1068 = vmatprep.subr.bf16.mxu0 0
        %1069 = vmatpush1.bf16.msra.mxu0 %v1033
        %1070 = vmatprep.subr.bf16.mxu0 0
        %1071 = vmatpush1.bf16.msra.mxu0 %v1034
        %1072 = vmatprep.subr.bf16.mxu0 0
        %1073 = vmatpush1.bf16.msra.mxu0 %v1035
        %1074 = vmatprep.subr.bf16.mxu0 0
        %1075 = vmatpush1.bf16.msra.mxu0 %v1036
        %1076 = vmatprep.subr.bf16.mxu0 0
        %1077 = vmatpush1.bf16.msra.mxu0 %v1037
        %1078 = vmatprep.subr.bf16.mxu0 0
        %1079 = vmatpush1.bf16.msra.mxu0 %v1038
        %1080 = vmatprep.subr.bf16.mxu0 0
        %1081 = vmatpush1.bf16.msra.mxu0 %v1039
        %1082 = vmatprep.subr.bf16.mxu0 0
        %1083 = vmatpush1.bf16.msra.mxu0 %v1040
        %1084 = vmatprep.subr.bf16.mxu0 0
        %1085 = vmatpush1.bf16.msra.mxu0 %v1041
        %1086 = vmatprep.subr.bf16.mxu0 0
        %1087 = vmatpush1.bf16.msra.mxu0 %v1042
        %1088 = vmatprep.subr.bf16.mxu0 0
        %1089 = vmatpush1.bf16.msra.mxu0 %v1043
        %1090 = vmatprep.subr.bf16.mxu0 0
        %1091 = vmatpush1.bf16.msra.mxu0 %v1044
        %1092 = vmatprep.subr.bf16.mxu0 0
        %1093 = vmatpush1.bf16.msra.mxu0 %v1045
        %1094 = vmatprep.mubr.bf16.mxu0 %v912
        %1095 = vmatmul.mubr.bf16.gmra.mrb[0].mxu0 %v911
        %v1096 = vpop.f32.mrb[0].mxu0
        %v1097 = vadd.f32 %v964, %v1096
        %v1098 = vpop.f32.mrb[0].mxu0
        %v1099 = vpop.f32.mrb[0].mxu0
        %v1100 = vadd.f32 %v964, %v1099
        %v1101 = vpop.f32.mrb[0].mxu0
        %1102 = vmatprep.mubr.bf16.mxu0 %v914
        %1103 = vmatmul.mubr.bf16.gmra.mrb[0].mxu0 %v913
        %v1104 = vpop.f32.mrb[0].mxu0
        %v1105 = vadd.f32 %v964, %v1104
        %v1106 = vpop.f32.mrb[0].mxu0
        %v1107 = vpop.f32.mrb[0].mxu0
        %v1108 = vadd.f32 %v964, %v1107
        %v1109 = vpop.f32.mrb[0].mxu0
        %1110 = vmatprep.mubr.bf16.mxu0 %v916
        %1111 = vmatmul.mubr.bf16.gmra.mrb[0].mxu0 %v915
        %v1112 = vpop.f32.mrb[0].mxu0
        %v1113 = vadd.f32 %v964, %v1112
        %v1114 = vpop.f32.mrb[0].mxu0
        %v1115 = vpop.f32.mrb[0].mxu0
        %v1116 = vadd.f32 %v964, %v1115
        %v1117 = vpop.f32.mrb[0].mxu0
        %1118 = vmatprep.mubr.bf16.mxu0 %v918
        %1119 = vmatmul.mubr.bf16.gmra.mrb[0].mxu0 %v917
        %v1120 = vpop.f32.mrb[0].mxu0
        %v1121 = vadd.f32 %v964, %v1120
        %v1122 = vpop.f32.mrb[0].mxu0
        %v1123 = vpop.f32.mrb[0].mxu0
        %v1124 = vadd.f32 %v964, %v1123
        %v1125 = vpop.f32.mrb[0].mxu0
        %1126 = vmatprep.mubr.bf16.mxu0 %v920
        %1127 = vmatmul.mubr.bf16.gmra.mrb[0].mxu0 %v919
        %v1128 = vpop.f32.mrb[0].mxu0
        %v1129 = vadd.f32 %v964, %v1128
        %v1130 = vpop.f32.mrb[0].mxu0
        %v1131 = vpop.f32.mrb[0].mxu0
        %v1132 = vadd.f32 %v964, %v1131
        %v1133 = vpop.f32.mrb[0].mxu0
        %1134 = vmatprep.mubr.bf16.mxu0 %v922
        %1135 = vmatmul.mubr.bf16.gmra.mrb[0].mxu0 %v921
        %v1136 = vpop.f32.mrb[0].mxu0
        %v1137 = vadd.f32 %v964, %v1136
        %v1138 = vpop.f32.mrb[0].mxu0
        %v1139 = vpop.f32.mrb[0].mxu0
        %v1140 = vadd.f32 %v964, %v1139
        %v1141 = vpop.f32.mrb[0].mxu0
        %1142 = vmatprep.mubr.bf16.mxu0 %v924
        %1143 = vmatmul.mubr.bf16.gmra.mrb[0].mxu0 %v923
        %v1144 = vpop.f32.mrb[0].mxu0
        %v1145 = vadd.f32 %v964, %v1144
        %v1146 = vpop.f32.mrb[0].mxu0
        %v1147 = vpop.f32.mrb[0].mxu0
        %v1148 = vadd.f32 %v964, %v1147
        %v1149 = vpop.f32.mrb[0].mxu0
        %1150 = vmatprep.mubr.bf16.mxu0 %v926
        %1151 = vmatmul.mubr.bf16.gmra.mrb[0].mxu0 %v925
        %v1152 = vpop.f32.mrb[0].mxu0
        %v1153 = vadd.f32 %v964, %v1152
        %v1154 = vpop.f32.mrb[0].mxu0
        %v1155 = vpop.f32.mrb[0].mxu0
        %v1156 = vadd.f32 %v964, %v1155
        %v1157 = vpop.f32.mrb[0].mxu0
        %1158 = vdwg.mxu0
        %1159 = vst [vmem:[%s287] sm:$0xff] %v1097
        %1160 = vst [vmem:[%s287 + $0x8] sm:$0xff] %v1100
        %1161 = vst [vmem:[%s287 + $0x10] sm:$0xff] %v1105
        %1162 = vst [vmem:[%s287 + $0x18] sm:$0xff] %v1108
        %1163 = vst [vmem:[%s287 + $0x20] sm:$0xff] %v1113
        %1164 = vst [vmem:[%s287 + $0x28] sm:$0xff] %v1116
        %1165 = vst [vmem:[%s287 + $0x30] sm:$0xff] %v1121
        %1166 = vst [vmem:[%s287 + $0x38] sm:$0xff] %v1124
        %1167 = vst [vmem:[%s287 + $0x40] sm:$0xff] %v1129
        %1168 = vst [vmem:[%s287 + $0x48] sm:$0xff] %v1132
        %1169 = vst [vmem:[%s287 + $0x50] sm:$0xff] %v1137
        %1170 = vst [vmem:[%s287 + $0x58] sm:$0xff] %v1140
        %1171 = vst [vmem:[%s287 + $0x60] sm:$0xff] %v1145
        %1172 = vst [vmem:[%s287 + $0x68] sm:$0xff] %v1148
        %1173 = vst [vmem:[%s287 + $0x70] sm:$0xff] %v1153
        %1174 = vst [vmem:[%s287 + $0x78] sm:$0xff] %v1156
        %s1175 = sand.u32 %s182, 1
        %s1176 = scalar_lea.sflag [#allocation4], %s1175
        %s1177 = sand.u32 %s182, 1
        %s1178 = smul.addr %s1177, 128
        %s1179 = scalar_lea.vmem [#allocation5], %s1178
        // Predicated region
        $region53: #{tpu_custom_call.1} parent=47 // pred_check
          %p1180 = pneg %p192
        $region54: #{tpu_custom_call.1} parent=47 // pred_check_branch
          %1182 = sbr.rel (%p1180) target = $region56
        $region55: #{tpu_custom_call.1} parent=47 // pred_region
          %s1183 = smul.u32 16, %s22
          %s1185 = ssub.s32 2048, 2048
          %1186 = vsyncadd %s1176, %s1185
          %s1187 = smul.addr %s1183, 128
          %s1188 = scalar_lea.hbm %s7, %s1187
          %s1189 = sshll.u32 %s1179, 4
          %s1190 = int_to_ptr.vmem [resolvable:$true] %s1189
          %1195 = dma.vmem_to_hbm [thread:$0]  %s1190, 2048, %s1188, %s1176, 128, 128, 8
        $region56: #{tpu_custom_call.1} parent=47 // pred_fallthru
          _
      $region48: #{tpu_custom_call.1} parent=5 // pred_fallthru
        _
      %p1196 = scmp.le.s32.totalorder 2, %s17
      // Predicated region
      $region57: #{tpu_custom_call.1} parent=5 // pred_check
        %p1197 = pneg %p1196
      $region58: #{tpu_custom_call.1} parent=5 // pred_check_branch
        %1199 = sbr.rel (%p1197) target = $region60
      $region59: #{tpu_custom_call.1} parent=5 // pred_region
        %s1200 = ssub.s32 %s17, 2
        // Predicated region
        $region61: #{tpu_custom_call.1} parent=59 // pred_check
          %p1201 = pneg %p198
        $region62: #{tpu_custom_call.1} parent=59 // pred_check_branch
          %1203 = sbr.rel (%p1201) target = $region64
        $region63: #{tpu_custom_call.1} parent=59 // pred_region
          %s1204 = sand.u32 %s183, 1
          %s1205 = scalar_lea.sflag [#allocation4], %s1204
          %s1206 = sand.u32 %s183, 1
          %s1207 = smul.addr %s1206, 128
          %s1208 = scalar_lea.vmem [#allocation5], %s1207
          %1209 = dma.done %s1205, 2048
        $region64: #{tpu_custom_call.1} parent=59 // pred_fallthru
          _
      $region60: #{tpu_custom_call.1} parent=5 // pred_fallthru
        _
    $region6: #{tpu_custom_call.1} parent=1 // loop_footer
      %s21 = sadd.s32 1, %s17
    $region7: #{tpu_custom_call.1} parent=1 // loop_footer_branch
      %16 = sbr.rel target = $region3
    $region8: #{tpu_custom_call.1} parent=1 // loop_exit
      _
    %1210 = vsyncpa [#allocation3], 1
    %s1211 = scalar_lea.sflag [#allocation3], 1
    %1212 = vsyncpa %s1211, 1
    %1213 = vsyncpa [#allocation4], 1
    %s1214 = scalar_lea.sflag [#allocation4], 1
    %1215 = vsyncpa %s1214, 1

</llo_original>
